<compile_context>
chip_gen: v5e
topology: v5e:2x2
jax: 0.10.0
libtpu: 0.0.40
codegen_flags: <defaults>
</compile_context>

<pallas_src>
import jax
import jax.numpy as jnp
from jax.experimental import pallas as pl
from jax.experimental.pallas import tpu as pltpu


def identity_kernel(x_ref, o_ref):
    # Pure pass-through of the current VMEM tile (HBM-bandwidth bound).
    o_ref[...] = x_ref[...]


def _choose_block(B, D, dtype, block_budget_bytes=4 * 1024 * 1024):
    """Pick a (tile_rows, tile_cols) block respecting TPU layout rules.

    - last dim: full D (legal for any D) unless D is a large multiple of 128,
      in which case tile it lane-dense in multiples of 128.
    - second-to-last dim: multiple of the sublane packing for the dtype
      (8 for 4-byte, 16 for 2-byte, 32 for 1-byte), sized to the VMEM budget.
    """
    itemsize = jnp.dtype(dtype).itemsize
    sublane = max(8, 32 // max(1, itemsize))

    if D % 128 != 0 or D <= 4096:
        tile_cols = D                      # full dim (always legal)
    else:
        tile_cols = 4096                   # lane-dense multiple of 128

    max_rows = max(1, block_budget_bytes // max(1, tile_cols * itemsize))
    tile_rows = max(sublane, (max_rows // sublane) * sublane)
    # Don't make the block taller than the (sublane-rounded) array.
    tile_rows = min(tile_rows, pl.cdiv(B, sublane) * sublane)
    return tile_rows, tile_cols


def identity(x, *, alias_input=False, block_budget_bytes=4 * 1024 * 1024):
    B, D = x.shape
    tile_rows, tile_cols = _choose_block(B, D, x.dtype, block_budget_bytes)
    grid = (pl.cdiv(B, tile_rows), pl.cdiv(D, tile_cols))

    block_bytes = tile_rows * tile_cols * jnp.dtype(x.dtype).itemsize
    # input + output, each double-buffered, plus some headroom; stays within
    # the smallest scoped-VMEM default (16 MiB on v5e) for the default budget.
    vmem_limit = min(max(4 * block_bytes + (2 << 20), 16 << 20), 48 << 20)

    return pl.pallas_call(
        identity_kernel,
        out_shape=jax.ShapeDtypeStruct((B, D), x.dtype),
        grid_spec=pltpu.PrefetchScalarGridSpec(
            num_scalar_prefetch=0,
            grid=grid,
            in_specs=[pl.BlockSpec((tile_rows, tile_cols), lambda i, j: (i, j))],
            out_specs=pl.BlockSpec((tile_rows, tile_cols), lambda i, j: (i, j)),
        ),
        compiler_params=pltpu.CompilerParams(
            dimension_semantics=("parallel", "parallel"),
            vmem_limit_bytes=vmem_limit,
        ),
        input_output_aliases=({0: 0} if alias_input else {}),
    )(x)


if __name__ == "__main__":
    key = jax.random.PRNGKey(0)

    # Small, lane-aligned case.
    x1 = jax.random.normal(key, (8, 128), dtype=jnp.float32)
    y1 = identity(x1)
    jax.block_until_ready(y1)
    assert y1.shape == x1.shape and y1.dtype == x1.dtype
    assert jnp.allclose(y1, x1)

    # Ragged case (B not a multiple of the row tile, D not a multiple of 128).
    k2 = jax.random.split(key)[0]
    x2 = jax.random.normal(k2, (30, 160), dtype=jnp.float32)
    expected2 = x2 + 0.0  # independent copy, safe even if x2 gets aliased
    y2 = identity(x2, alias_input=True)
    jax.block_until_ready(y2)
    assert y2.shape == expected2.shape and y2.dtype == expected2.dtype
    assert jnp.allclose(y2, expected2)

    print("KERNEL_OK")
</pallas_src>

<mosaic_0001>
module attributes {stable_mosaic.version = 11 : i64} {
  func.func @identity_kernel(%arg0: i32, %arg1: i32, %arg2: memref<8x128xf32, #tpu.memory_space<vmem>>, %arg3: memref<8x128xf32, #tpu.memory_space<vmem>>) attributes {dimension_semantics = [#tpu.dimension_semantics<parallel>, #tpu.dimension_semantics<parallel>], iteration_bounds = array<i64: 1, 1>, scalar_prefetch = 0 : i64, scratch_operands = 0 : i64, tpu.core_type = #tpu.core_type<tc>, window_params = [{transform_indices = @transform_0, window_bounds = array<i64: 8, 128>}, {transform_indices = @transform_1, window_bounds = array<i64: 8, 128>}]} {
    %c0 = arith.constant 0 : index
    %c0_0 = arith.constant 0 : index
    %0 = vector.load %arg2[%c0, %c0_0] : memref<8x128xf32, #tpu.memory_space<vmem>>, vector<8x128xf32>
    %c0_1 = arith.constant 0 : index
    %c0_2 = arith.constant 0 : index
    %1 = vector.load %arg3[%c0_1, %c0_2] : memref<8x128xf32, #tpu.memory_space<vmem>>, vector<8x128xf32>
    tpu.vector_store %arg3[%c0_1, %c0_2], %0 {strides = array<i32>} : memref<8x128xf32, #tpu.memory_space<vmem>>, vector<8x128xf32>,
    return
  }
  func.func @transform_0(%arg0: i32, %arg1: i32) -> (i32, i32) {
    %c0_i32 = arith.constant 0 : i32
    return %arg0, %arg1 : i32, i32
  }
  func.func @transform_1(%arg0: i32, %arg1: i32) -> (i32, i32) {
    %c0_i32 = arith.constant 0 : i32
    return %arg0, %arg1 : i32, i32
  }
}

</mosaic_0001>

<llo_original>
// kernel: tpu_custom_call.1
$region0: #{tpu_custom_call.1}
  #allocation0 [shape = 'u32[]', space=smem, size = 0x4, offset = 0x4, fixed_abs, tag = 'smem constant byte address 0x4 - core index']
  #allocation1 [shape = 'u32[72,128]{1,0:T(1,128)}', space=vmem, size = 0x9000, scoped, tag = 'internal scratch']
  %s0 = inlined_call_operand.hbm [shape: f32[8,128], index: 0, kind: input, shape index: {}]
  %s1 = inlined_call_operand.hbm [shape: f32[8,128], index: 1, kind: output, shape index: {}]
  %s2 = sld [smem:[#allocation0]]
  $region18: #{tpu_custom_call.1} parent=0
    _
  %s4 = ssub.s32 1, %s2
  %s5 = scalar_select 0, %s4, %s2
  $region1: #{tpu_custom_call.1} parent=0
    #allocation2 [shape = 'u8[4096]{0}', space=vmem, size = 0x1000, scoped, tag = 'input window, operand 0, single buffered']
    #allocation3 [shape = 's32[1]{0}', space=sflag, size = 0x4, scoped, tag = 'scoped memory for tpu_custom_call.1']
    #allocation4 [shape = 's32[1]{0}', space=sflag, size = 0x4, scoped, tag = 'scoped memory for tpu_custom_call.1']
    #allocation5 [shape = 'u8[4096]{0}', space=vmem, size = 0x1000, scoped, tag = 'output window, operand 0, single buffered']
    %6 = vsyncpa [#allocation3], 0
    %7 = vsyncpa [#allocation4], 0
    // Predicated region
    $region2: #{tpu_custom_call.1} parent=1 // pred_check
      _
    $region3: #{tpu_custom_call.1} parent=1 // pred_check_branch
      %9 = sbr.rel (0) target = $region5
    $region4: #{tpu_custom_call.1} parent=1 // pred_region
      %11 = vsyncadd [#allocation3], 0
      %s13 = sshll.u32 %s0, 4
      %s14 = int_to_ptr.hbm [resolvable:$true] %s13
      %s15 = sshll.u32 [#allocation2], 4
      %s16 = int_to_ptr.vmem [resolvable:$true] %s15
      %18 = dma.hbm_to_vmem [thread:$0]  %s14, 128, %s16, [#allocation3]
    $region5: #{tpu_custom_call.1} parent=1 // pred_fallthru
      _
    // Predicated region
    $region6: #{tpu_custom_call.1} parent=1 // pred_check
      _
    $region7: #{tpu_custom_call.1} parent=1 // pred_check_branch
      %20 = sbr.rel (0) target = $region9
    $region8: #{tpu_custom_call.1} parent=1 // pred_region
      %22 = dma.done [#allocation3], 128
    $region9: #{tpu_custom_call.1} parent=1 // pred_fallthru
      _
    %v23 = vld [vmem:[#allocation2] sm:$0xff]
    %24 = vst [vmem:[#allocation5] sm:$0xff] %v23
    // Predicated region
    $region10: #{tpu_custom_call.1} parent=1 // pred_check
      _
    $region11: #{tpu_custom_call.1} parent=1 // pred_check_branch
      %26 = sbr.rel (0) target = $region13
    $region12: #{tpu_custom_call.1} parent=1 // pred_region
      %28 = vsyncadd [#allocation4], 0
      %s30 = sshll.u32 [#allocation5], 4
      %s31 = int_to_ptr.vmem [resolvable:$true] %s30
      %s32 = sshll.u32 %s1, 4
      %s33 = int_to_ptr.hbm [resolvable:$true] %s32
      %35 = dma.vmem_to_hbm [thread:$0]  %s31, 128, %s33, [#allocation4]
    $region13: #{tpu_custom_call.1} parent=1 // pred_fallthru
      _
    // Predicated region
    $region14: #{tpu_custom_call.1} parent=1 // pred_check
      _
    $region15: #{tpu_custom_call.1} parent=1 // pred_check_branch
      %37 = sbr.rel (0) target = $region17
    $region16: #{tpu_custom_call.1} parent=1 // pred_region
      %39 = dma.done [#allocation4], 128
    $region17: #{tpu_custom_call.1} parent=1 // pred_fallthru
      _
    %40 = vsyncpa [#allocation3], 1
    %41 = vsyncpa [#allocation4], 1

</llo_original>
